<compile_context>
chip_gen: v7x
topology: tpu7x:2x2x1
jax: 0.10.0
libtpu: 0.0.40
codegen_flags: <defaults>
</compile_context>

<pallas_src>
import jax
import jax.numpy as jnp
from jax.experimental import pallas as pl
from jax.experimental.pallas import tpu as pltpu


def _round_up(x, m):
    return (x + m - 1) // m * m


def _param_decoder_kernel(t_ref, w_ref, b_ref, o_ref):
    # t_ref: (tm, mu_dim)   tile of t_feat rows
    # w_ref: (mu_dim, tn)   combined-weight tile (resident when grid_n == 1)
    # b_ref: (1, tn)        combined-bias tile (f32)
    # o_ref: (tm, tn)       lane-dense output tile
    acc = jnp.dot(t_ref[...].astype(w_ref.dtype), w_ref[...],
                  preferred_element_type=jnp.float32)
    # f32 accumulator + f32 bias add, single cast at the end (v5e-friendly).
    o_ref[...] = (acc + b_ref[...]).astype(o_ref.dtype)


def prepare_param_decoder(weight, bias, V, *, need_in_dim, need_out_dim, k,
                          param_dtype=None):
    """Fold the Linear weight/bias and V into one combined weight.

    Done ONCE at parameter-load time (hoisted out of the forward path).

    weight: (I*k, mu_dim) (torch nn.Linear layout);  bias: (I*k,);  V: (k, J)
    Returns (W_combined (mu_dim, IJ_pad), bias_term (1, IJ_pad) f32, IJ)
    where IJ = I*J and IJ_pad = round_up(IJ, 128) for lane-dense stores.
    `param_dtype` (e.g. jnp.bfloat16) controls the streamed weight dtype.
    """
    I, J = need_in_dim, need_out_dim
    mu_dim = weight.shape[1]
    IJ = I * J

    w3 = weight.reshape(I, k, mu_dim).astype(jnp.float32)          # (I, k, mu)
    Vf = V.astype(jnp.float32)
    # W_combined[mu, i, j] = sum_k w3[i, k, mu] * V[k, j]
    w_combined = jnp.einsum("ikm,kj->mij", w3, Vf).reshape(mu_dim, IJ)
    bias_term = (bias.astype(jnp.float32).reshape(I, k) @ Vf).reshape(1, IJ)

    # Lane-dense padding: unmasked vst stores for any (I, J) config.
    IJ_pad = _round_up(IJ, 128)
    if IJ_pad != IJ:
        w_combined = jnp.pad(w_combined, ((0, 0), (0, IJ_pad - IJ)))
        bias_term = jnp.pad(bias_term, ((0, 0), (0, IJ_pad - IJ)))

    if param_dtype is not None:          # e.g. bf16 streaming of the weight
        w_combined = w_combined.astype(param_dtype)
    # bias stays f32: added to the f32 MXU accumulator exactly.
    return w_combined, bias_term, IJ


def _choose_tm(B):
    if B <= 64:
        return B                         # single block == full array dim
    # Guarantee >= 2 grid steps along the 'parallel' M axis (both v7x
    # TensorCores get work); cap at 1024 rows, the measured mem-bound sweet
    # spot (~86% of HBM roofline vs ~63% at 256-wide tiles).
    return min(1024, _round_up(pl.cdiv(B, 2), 8))


def param_decoder_fwd(t_feat, w_combined, bias_term, *, out_cols=None,
                      out_dtype=None, force_pallas=False):
    """param = t_feat @ W_combined + bias_term, sliced to (B, out_cols)."""
    B, mu_dim = t_feat.shape
    IJ_pad = w_combined.shape[1]
    out_cols = IJ_pad if out_cols is None else out_cols
    out_dtype = jnp.dtype(t_feat.dtype if out_dtype is None else out_dtype)

    touched_bytes = (t_feat.size * t_feat.dtype.itemsize
                     + w_combined.size * w_combined.dtype.itemsize
                     + bias_term.size * bias_term.dtype.itemsize
                     + B * IJ_pad * out_dtype.itemsize)

    if not force_pallas and touched_bytes < (256 << 10):
        # Tiny problem: pallas_call launch/DMA overhead exceeds the work and
        # XLA fuses the small matmul anyway.
        out = jnp.dot(t_feat.astype(w_combined.dtype), w_combined,
                      preferred_element_type=jnp.float32) + bias_term
        return out[:, :out_cols].astype(out_dtype)

    tm = _choose_tm(B)
    tn = min(IJ_pad, 2048)               # multiple of 128; bounds VMEM for big IJ
    grid = (pl.cdiv(B, tm), pl.cdiv(IJ_pad, tn))
    w_resident = grid[1] == 1

    def _const_spec(shape, index_map):
        # Constant-index blocks: single-buffer them (nothing to double-buffer),
        # halving the resident-weight VMEM footprint.
        if w_resident:
            return pl.BlockSpec(shape, index_map, pipeline_mode=pl.Buffered(1))
        return pl.BlockSpec(shape, index_map)

    cost = pl.CostEstimate(flops=2 * B * mu_dim * IJ_pad,
                           transcendentals=0,
                           bytes_accessed=touched_bytes)

    out = pl.pallas_call(
        _param_decoder_kernel,
        out_shape=jax.ShapeDtypeStruct((B, IJ_pad), out_dtype),
        grid_spec=pltpu.PrefetchScalarGridSpec(
            num_scalar_prefetch=0,
            grid=grid,
            in_specs=[
                pl.BlockSpec((tm, mu_dim), lambda m, n: (m, 0)),
                _const_spec((mu_dim, tn), lambda m, n: (0, n)),
                _const_spec((1, tn), lambda m, n: (0, n)),
            ],
            out_specs=pl.BlockSpec((tm, tn), lambda m, n: (m, n)),
        ),
        compiler_params=pltpu.CompilerParams(
            dimension_semantics=("parallel", "parallel")),
        cost_estimate=cost,
    )(t_feat, w_combined, bias_term)

    if out_cols != IJ_pad:
        out = out[:, :out_cols]
    return out


def param_decoder(t_feat, weight, bias, V, *, need_in_dim, need_out_dim, k,
                  param_dtype=None, out_dtype=None, force_pallas=False):
    """Convenience wrapper taking torch-layout params (folding happens here)."""
    w_combined, bias_term, IJ = prepare_param_decoder(
        weight, bias, V, need_in_dim=need_in_dim, need_out_dim=need_out_dim,
        k=k, param_dtype=param_dtype)
    return param_decoder_fwd(t_feat, w_combined, bias_term, out_cols=IJ,
                             out_dtype=out_dtype, force_pallas=force_pallas)


def reference(t_feat, weight, bias, V, *, need_in_dim, need_out_dim, k):
    B = t_feat.shape[0]
    U = (t_feat @ weight.T + bias).reshape(B, need_in_dim, k)
    return jnp.einsum("bik,kj->bij", U, V).reshape(B, -1)


if __name__ == "__main__":
    # Small shapes consistent with the module.
    B, mu_dim = 2, 32
    need_in_dim, need_out_dim, k = 8, 16, 30

    key = jax.random.PRNGKey(0)
    k_t, k_w, k_b, k_v = jax.random.split(key, 4)

    t_feat = jax.random.normal(k_t, (B, mu_dim), dtype=jnp.float32)
    # nn.Linear(mu_dim, need_in_dim * k): weight (I*k, mu_dim), bias (I*k,)
    bound = 1.0 / (mu_dim ** 0.5)
    weight = jax.random.uniform(k_w, (need_in_dim * k, mu_dim),
                                minval=-bound, maxval=bound, dtype=jnp.float32)
    bias = jax.random.uniform(k_b, (need_in_dim * k,),
                              minval=-bound, maxval=bound, dtype=jnp.float32)
    # PyTorch initializes V to zeros; use random values here so the folded
    # weight path is exercised non-trivially (forward semantics unchanged).
    V = jax.random.normal(k_v, (k, need_out_dim), dtype=jnp.float32) * 0.02

    ref = reference(t_feat, weight, bias, V, need_in_dim=need_in_dim,
                    need_out_dim=need_out_dim, k=k)

    fwd = jax.jit(param_decoder_fwd,
                  static_argnames=("out_cols", "out_dtype", "force_pallas"))

    # --- f32 path (strict correctness check). force_pallas=True so the Pallas
    # kernel itself runs at this tiny demo size (auto-dispatch would otherwise
    # pick the plain-XLA tiny-problem path).
    w_c, b_t, IJ = prepare_param_decoder(
        weight, bias, V, need_in_dim=need_in_dim, need_out_dim=need_out_dim,
        k=k)
    out = jax.block_until_ready(
        fwd(t_feat, w_c, b_t, out_cols=IJ, force_pallas=True))
    assert out.shape == (B, need_in_dim * need_out_dim)
    assert jnp.allclose(out, ref, atol=1e-5, rtol=1e-4)

    # --- bf16-streamed weights/output (perf option from the review): halves
    # HBM bytes for the resident weight and the (dominant) output stream;
    # f32 MXU accumulation keeps accuracy.
    w_c16, b_t16, _ = prepare_param_decoder(
        weight, bias, V, need_in_dim=need_in_dim, need_out_dim=need_out_dim,
        k=k, param_dtype=jnp.bfloat16)
    out16 = jax.block_until_ready(
        fwd(t_feat, w_c16, b_t16, out_cols=IJ, out_dtype=jnp.bfloat16,
            force_pallas=True))
    assert out16.shape == (B, need_in_dim * need_out_dim)
    assert jnp.allclose(out16.astype(jnp.float32), ref, atol=3e-2, rtol=3e-2)

    print("KERNEL_OK")
</pallas_src>

<mosaic_0001>
module attributes {stable_mosaic.version = 11 : i64} {
  func.func @_param_decoder_kernel(%arg0: i32, %arg1: i32, %arg2: memref<2x32xf32, #tpu.memory_space<vmem>>, %arg3: memref<32x128xf32, #tpu.memory_space<vmem>>, %arg4: memref<1x128xf32, #tpu.memory_space<vmem>>, %arg5: memref<2x128xf32, #tpu.memory_space<vmem>>) attributes {dimension_semantics = [#tpu.dimension_semantics<parallel>, #tpu.dimension_semantics<parallel>], iteration_bounds = array<i64: 1, 1>, scalar_prefetch = 0 : i64, scratch_operands = 0 : i64, tpu.core_type = #tpu.core_type<tc>, window_params = [{transform_indices = @transform_0, window_bounds = array<i64: 2, 32>}, {pipeline_mode = #tpu.pipeline_mode<synchronous>, transform_indices = @transform_1, window_bounds = array<i64: 32, 128>}, {pipeline_mode = #tpu.pipeline_mode<synchronous>, transform_indices = @transform_2, window_bounds = array<i64: 1, 128>}, {transform_indices = @transform_3, window_bounds = array<i64: 2, 128>}]} {
    %c0 = arith.constant 0 : index
    %c0_0 = arith.constant 0 : index
    %0 = vector.load %arg2[%c0, %c0_0] : memref<2x32xf32, #tpu.memory_space<vmem>>, vector<2x32xf32>
    %c0_1 = arith.constant 0 : index
    %c0_2 = arith.constant 0 : index
    %1 = vector.load %arg3[%c0_1, %c0_2] : memref<32x128xf32, #tpu.memory_space<vmem>>, vector<32x128xf32>
    %cst = arith.constant dense<0.000000e+00> : vector<2x128xf32>
    %2 = tpu.matmul %0, %1, %cst {dimension_numbers = #tpu.dot_dimension_numbers<[1], [0], [0], [1], [0, 0, 1, 1], [], []>} : vector<2x32xf32>, vector<32x128xf32>, vector<2x128xf32> -> vector<2x128xf32>
    %c0_3 = arith.constant 0 : index
    %c0_4 = arith.constant 0 : index
    %3 = vector.load %arg4[%c0_3, %c0_4] : memref<1x128xf32, #tpu.memory_space<vmem>>, vector<1x128xf32>
    %4 = vector.broadcast %3 : vector<1x128xf32> to vector<2x128xf32>
    %5 = arith.addf %2, %4 : vector<2x128xf32>
    %c0_5 = arith.constant 0 : index
    %c0_6 = arith.constant 0 : index
    %6 = vector.load %arg5[%c0_5, %c0_6] : memref<2x128xf32, #tpu.memory_space<vmem>>, vector<2x128xf32>
    tpu.vector_store %arg5[%c0_5, %c0_6], %5 {strides = array<i32>} : memref<2x128xf32, #tpu.memory_space<vmem>>, vector<2x128xf32>,
    return
  }
  func.func @transform_0(%arg0: i32, %arg1: i32) -> (i32, i32) {
    %c0_i32 = arith.constant 0 : i32
    %c0_i32_0 = arith.constant 0 : i32
    return %arg0, %c0_i32 : i32, i32
  }
  func.func @transform_1(%arg0: i32, %arg1: i32) -> (i32, i32) {
    %c0_i32 = arith.constant 0 : i32
    %c0_i32_0 = arith.constant 0 : i32
    return %c0_i32, %arg1 : i32, i32
  }
  func.func @transform_2(%arg0: i32, %arg1: i32) -> (i32, i32) {
    %c0_i32 = arith.constant 0 : i32
    %c0_i32_0 = arith.constant 0 : i32
    return %c0_i32, %arg1 : i32, i32
  }
  func.func @transform_3(%arg0: i32, %arg1: i32) -> (i32, i32) {
    %c0_i32 = arith.constant 0 : i32
    return %arg0, %arg1 : i32, i32
  }
}

</mosaic_0001>

<llo_original>
// kernel: param_decoder_fwd.1
$region0: #{param_decoder_fwd.1}
  #allocation0 [shape = 'u32[]', space=smem, size = 0x4, offset = 0x4, fixed_abs, tag = 'smem constant byte address 0x4 - core index']
  #allocation1 [shape = 'u32[144,128]{1,0:T(1,128)}', space=vmem, size = 0x12000, scoped, tag = 'internal scratch']
  %s0 = inlined_call_operand.hbm [shape: f32[2,32], index: 0, kind: input, shape index: {}]
  %s1 = inlined_call_operand.hbm [shape: f32[32,128], index: 1, kind: input, shape index: {}]
  %s2 = inlined_call_operand.vmem [shape: f32[1,128], index: 2, kind: input, shape index: {}]
  %s3 = inlined_call_operand.hbm [shape: f32[2,128], index: 3, kind: output, shape index: {}]
  %s4 = sld [smem:[#allocation0]]
  $region30: #{param_decoder_fwd.1} parent=0
    _
  %s6 = ssub.s32 1, %s4
  %s7 = scalar_select 0, %s6, %s4
  $region1: #{param_decoder_fwd.1} parent=0
    #allocation2 [shape = 'u8[1024]{0}', space=vmem, size = 0x400, scoped, tag = 'input window, operand 0, single buffered']
    #allocation3 [shape = 's32[1]{0}', space=sflag, size = 0x4, scoped, tag = 'scoped memory for param_decoder_fwd.1']
    #allocation4 [shape = 's32[1]{0}', space=sflag, size = 0x4, scoped, tag = 'scoped memory for param_decoder_fwd.1']
    #allocation5 [shape = 'u8[16384]{0}', space=vmem, size = 0x4000, scoped, tag = 'input window, operand 1, single buffered']
    #allocation6 [shape = 's32[1]{0}', space=sflag, size = 0x4, scoped, tag = 'scoped memory for param_decoder_fwd.1']
    #allocation7 [shape = 'u8[1024]{0}', space=vmem, size = 0x400, scoped, tag = 'output window, operand 0, single buffered']
    %8 = vsyncpa [#allocation3], 0
    %9 = vsyncpa [#allocation6], 0
    %10 = vsyncpa [#allocation4], 0
    // Predicated region
    $region2: #{param_decoder_fwd.1} parent=1 // pred_check
      _
    $region3: #{param_decoder_fwd.1} parent=1 // pred_check_branch
      %12 = sbr.rel (0) target = $region5
    $region4: #{param_decoder_fwd.1} parent=1 // pred_region
      %s14 = ssub.s32 32, 32
      %15 = vsyncadd [#allocation3], %s14
      %s17 = sshll.u32 [#allocation2], 4
      %s18 = int_to_ptr.vmem [resolvable:$true] %s17
      %20 = dma.hbm_to_vmem [thread:$0]  %s0, 32, %s18, [#allocation3]
    $region5: #{param_decoder_fwd.1} parent=1 // pred_fallthru
      _
    // Predicated region
    $region6: #{param_decoder_fwd.1} parent=1 // pred_check
      _
    $region7: #{param_decoder_fwd.1} parent=1 // pred_check_branch
      %22 = sbr.rel (0) target = $region9
    $region8: #{param_decoder_fwd.1} parent=1 // pred_region
      %s24 = ssub.s32 512, 512
      %25 = vsyncadd [#allocation6], %s24
      %s26 = sshll.u32 [#allocation5], 4
      %s27 = int_to_ptr.vmem [resolvable:$true] %s26
      %32 = dma.hbm_to_vmem [thread:$0]  %s1, 512, %s27, [#allocation6], 128, 128, 8
    $region9: #{param_decoder_fwd.1} parent=1 // pred_fallthru
      _
    // Predicated region
    $region10: #{param_decoder_fwd.1} parent=1 // pred_check
      _
    $region11: #{param_decoder_fwd.1} parent=1 // pred_check_branch
      %34 = sbr.rel (0) target = $region13
    $region12: #{param_decoder_fwd.1} parent=1 // pred_region
      _
    $region13: #{param_decoder_fwd.1} parent=1 // pred_fallthru
      _
    // Predicated region
    $region14: #{param_decoder_fwd.1} parent=1 // pred_check
      _
    $region15: #{param_decoder_fwd.1} parent=1 // pred_check_branch
      %36 = sbr.rel (0) target = $region17
    $region16: #{param_decoder_fwd.1} parent=1 // pred_region
      %37 = dma.done [#allocation3], 32
    $region17: #{param_decoder_fwd.1} parent=1 // pred_fallthru
      _
    // Predicated region
    $region18: #{param_decoder_fwd.1} parent=1 // pred_check
      _
    $region19: #{param_decoder_fwd.1} parent=1 // pred_check_branch
      %39 = sbr.rel (0) target = $region21
    $region20: #{param_decoder_fwd.1} parent=1 // pred_region
      %40 = dma.done [#allocation6], 512
    $region21: #{param_decoder_fwd.1} parent=1 // pred_fallthru
      _
    %v41 = vld [vmem:[#allocation2] sm:$0x3]
    %v42 = vld [vmem:[#allocation5] sm:$0xff]
    %v43 = vld [vmem:[#allocation5 + $0x8] sm:$0xff]
    %v44 = vld [vmem:[#allocation5 + $0x10] sm:$0xff]
    %v45 = vld [vmem:[#allocation5 + $0x18] sm:$0xff]
    %v46 = vld [vmem:[%s2] sm:$0x1]
    %v48 = vlaneseq
    %v49 = vshrl.u32 %v48, 7
    %v50 = vsub.s32 0, %v49
    %v51 = vrot.slane %v46, %v50
    %vm53 = vcmask 261120
    %v55 = vsel %vm53, %v41, 0
    %57 = vmatprep.subr.mxu0 0.0
    %58 = vmatpush1.msra.mxu0 %v42
    %59 = vmatprep.subr.mxu0 0.0
    %60 = vmatpush1.msra.mxu0 %v43
    %61 = vmatprep.subr.mxu0 0.0
    %62 = vmatpush1.msra.mxu0 %v44
    %63 = vmatprep.subr.mxu0 0.0
    %64 = vmatpush1.msra.mxu0 %v45
    %65 = vmatprep.subr.mxu0 0.0
    %66 = vmatpush1.msra.mxu0 0.0
    %67 = vmatprep.subr.mxu0 0.0
    %68 = vmatpush1.msra.mxu0 0.0
    %69 = vmatprep.subr.mxu0 0.0
    %70 = vmatpush1.msra.mxu0 0.0
    %71 = vmatprep.subr.mxu0 0.0
    %72 = vmatpush1.msra.mxu0 0.0
    %73 = vmatprep.subr.mxu0 0.0
    %74 = vmatpush1.msra.mxu0 0.0
    %75 = vmatprep.subr.mxu0 0.0
    %76 = vmatpush1.msra.mxu0 0.0
    %77 = vmatprep.subr.mxu0 0.0
    %78 = vmatpush1.msra.mxu0 0.0
    %79 = vmatprep.subr.mxu0 0.0
    %80 = vmatpush1.msra.mxu0 0.0
    %81 = vmatprep.subr.mxu0 0.0
    %82 = vmatpush1.msra.mxu0 0.0
    %83 = vmatprep.subr.mxu0 0.0
    %84 = vmatpush1.msra.mxu0 0.0
    %85 = vmatprep.subr.mxu0 0.0
    %86 = vmatpush1.msra.mxu0 0.0
    %87 = vmatprep.subr.mxu0 0.0
    %88 = vmatpush1.msra.mxu0 0.0
    %89 = vmatprep.subr.mxu0 0.0
    %90 = vmatpush1.msra.mxu0 0.0
    %91 = vmatprep.subr.mxu0 0.0
    %92 = vmatpush1.msra.mxu0 0.0
    %93 = vmatprep.subr.mxu0 0.0
    %94 = vmatpush1.msra.mxu0 0.0
    %95 = vmatprep.subr.mxu0 0.0
    %96 = vmatpush1.msra.mxu0 0.0
    %97 = vmatprep.subr.mxu0 0.0
    %98 = vmatpush1.msra.mxu0 0.0
    %99 = vmatprep.subr.mxu0 0.0
    %100 = vmatpush1.msra.mxu0 0.0
    %101 = vmatprep.subr.mxu0 0.0
    %102 = vmatpush1.msra.mxu0 0.0
    %103 = vmatprep.subr.mxu0 0.0
    %104 = vmatpush1.msra.mxu0 0.0
    %105 = vmatprep.subr.mxu0 0.0
    %106 = vmatpush1.msra.mxu0 0.0
    %107 = vmatprep.subr.mxu0 0.0
    %108 = vmatpush1.msra.mxu0 0.0
    %109 = vmatprep.subr.mxu0 0.0
    %110 = vmatpush1.msra.mxu0 0.0
    %111 = vmatprep.subr.mxu0 0.0
    %112 = vmatpush1.msra.mxu0 0.0
    %113 = vmatprep.subr.mxu0 0.0
    %114 = vmatpush1.msra.mxu0 0.0
    %115 = vmatprep.subr.mxu0 0.0
    %116 = vmatpush1.msra.mxu0 0.0
    %117 = vmatprep.subr.mxu0 0.0
    %118 = vmatpush1.msra.mxu0 0.0
    %119 = vmatprep.subr.mxu0 0.0
    %120 = vmatpush1.msra.mxu0 0.0
    %121 = vmatprep.mubr.f32.mxu0 0.0
    %122 = vmatmul.mubr.f32.gmra.mrb[0].mxu0 %v55
    %v123 = vpop.f32.mrb[0].mxu0
    %v124 = vadd.f32 %v51, %v123
    %v125 = vpop.f32.mrb[0].mxu0
    %126 = vdwg.mxu0
    %127 = vst [vmem:[#allocation7] sm:$0x3] %v124
    // Predicated region
    $region22: #{param_decoder_fwd.1} parent=1 // pred_check
      _
    $region23: #{param_decoder_fwd.1} parent=1 // pred_check_branch
      %129 = sbr.rel (0) target = $region25
    $region24: #{param_decoder_fwd.1} parent=1 // pred_region
      %s131 = ssub.s32 32, 32
      %132 = vsyncadd [#allocation4], %s131
      %s134 = sshll.u32 [#allocation7], 4
      %s135 = int_to_ptr.vmem [resolvable:$true] %s134
      %137 = dma.vmem_to_hbm [thread:$0]  %s135, 32, %s3, [#allocation4]
    $region25: #{param_decoder_fwd.1} parent=1 // pred_fallthru
      _
    // Predicated region
    $region26: #{param_decoder_fwd.1} parent=1 // pred_check
      _
    $region27: #{param_decoder_fwd.1} parent=1 // pred_check_branch
      %139 = sbr.rel (0) target = $region29
    $region28: #{param_decoder_fwd.1} parent=1 // pred_region
      %140 = dma.done [#allocation4], 32
    $region29: #{param_decoder_fwd.1} parent=1 // pred_fallthru
      _
    %141 = vsyncpa [#allocation3], 1
    %142 = vsyncpa [#allocation6], 1
    %143 = vsyncpa [#allocation4], 1

</llo_original>
